<compile_context>
chip_gen: v6e
topology: v6e:2x2x1
jax: 0.10.0
libtpu: 0.0.40
codegen_flags: <defaults>
</compile_context>

<pallas_src>
import functools

import jax
import jax.numpy as jnp
from jax import lax
from jax.experimental import pallas as pl
from jax.experimental.pallas import tpu as pltpu


# ----------------------------------------------------------------------------
# helpers
# ----------------------------------------------------------------------------
def _round_up(x, m):
    return ((x + m - 1) // m) * m


def _pad_rows(x2, tile_rows):
    """Pad the leading (row) axis up to a multiple of tile_rows."""
    m = x2.shape[0]
    mp = _round_up(m, tile_rows)
    if mp != m:
        x2 = jnp.pad(x2, ((0, mp - m), (0, 0)))
    return x2, m


def _pick_divisor_tile(d, target, align):
    """Largest multiple of `align` <= target that divides d; else full d."""
    if d <= target:
        return d
    t = (min(target, d) // align) * align
    while t >= align:
        if d % t == 0:
            return t
        t -= align
    return d


# ----------------------------------------------------------------------------
# Standalone LayerNorm kernel (fallback only; LN is normally fused into the
# consuming matmul kernel below)
# ----------------------------------------------------------------------------
def _layernorm_kernel(x_ref, g_ref, b_ref, o_ref, *, eps):
    x = x_ref[...].astype(jnp.float32)            # (TM, C)
    c = x.shape[-1]
    s1 = jnp.sum(x, axis=-1, keepdims=True)
    s2 = jnp.sum(x * x, axis=-1, keepdims=True)
    mean = s1 * (1.0 / c)
    var = s2 * (1.0 / c) - mean * mean            # biased var (matches torch)
    rstd = lax.rsqrt(var + eps)
    scale = rstd * g_ref[...].astype(jnp.float32)
    shift = b_ref[...].astype(jnp.float32) - mean * scale
    o_ref[...] = (x * scale + shift).astype(o_ref.dtype)


def _layer_norm(x2, gamma, beta, *, eps=1e-5):
    m, c = x2.shape
    rows_budget = max(8, (((1 << 21) // max(c * 4, 1)) // 8) * 8)
    tile_rows = min(min(rows_budget, 1024), _round_up(m, 8))
    xp, m0 = _pad_rows(x2, tile_rows)
    mp = xp.shape[0]

    out = pl.pallas_call(
        functools.partial(_layernorm_kernel, eps=eps),
        out_shape=jax.ShapeDtypeStruct((mp, c), x2.dtype),
        grid_spec=pltpu.PrefetchScalarGridSpec(
            num_scalar_prefetch=0,
            grid=(mp // tile_rows,),
            in_specs=[
                pl.BlockSpec((tile_rows, c), lambda i: (i, 0)),
                pl.BlockSpec((1, c), lambda i: (0, 0)),
                pl.BlockSpec((1, c), lambda i: (0, 0)),
            ],
            out_specs=pl.BlockSpec((tile_rows, c), lambda i: (i, 0)),
        ),
        compiler_params=pltpu.CompilerParams(
            dimension_semantics=("parallel",)),
    )(xp, gamma.reshape(1, c), beta.reshape(1, c))
    return out[:m0]


# ----------------------------------------------------------------------------
# Linear kernel: (optional fused LayerNorm) + matmul + bias (+ GELU)
#                (+ fused residual add with 1/skip_lam scale)
# ----------------------------------------------------------------------------
def _linear_kernel(*refs, activation, residual_scale, has_residual, has_ln,
                   ln_eps, use_acc):
    it = iter(refs)
    x_ref = next(it)
    w_ref = next(it)
    b_ref = next(it)
    g_ref = next(it) if has_ln else None
    bn_ref = next(it) if has_ln else None
    r_ref = next(it) if has_residual else None
    o_ref = next(it)
    acc_ref = next(it) if use_acc else None

    x = x_ref[...]
    if has_ln:
        # fused pre-LayerNorm over the full channel axis (tk == K)
        xf = x.astype(jnp.float32)
        c = xf.shape[-1]
        s1 = jnp.sum(xf, axis=-1, keepdims=True)
        s2 = jnp.sum(xf * xf, axis=-1, keepdims=True)
        mean = s1 * (1.0 / c)
        var = s2 * (1.0 / c) - mean * mean
        rstd = lax.rsqrt(var + ln_eps)
        scale = rstd * g_ref[...].astype(jnp.float32)
        shift = bn_ref[...].astype(jnp.float32) - mean * scale
        x = (xf * scale + shift).astype(x_ref.dtype)

    part = jnp.dot(x, w_ref[...], preferred_element_type=jnp.float32)

    def finalize(y):
        y = y + b_ref[...].astype(jnp.float32)
        if activation == "gelu":
            # TODO(synk): nn.GELU default is the exact erf form; tanh-GELU is
            # used in-kernel (erf lowering is not guaranteed in Mosaic).
            kc = jnp.float32(0.7978845608028654)  # sqrt(2/pi)
            y = 0.5 * y * (1.0 + jnp.tanh(kc * (y + 0.044715 * y * y * y)))
        if has_residual:
            y = r_ref[...].astype(jnp.float32) + y * residual_scale
        o_ref[...] = y.astype(o_ref.dtype)

    if use_acc:
        @pl.when(pl.program_id(2) == 0)
        def _():
            acc_ref[...] = jnp.zeros_like(acc_ref)

        acc_ref[...] += part

        @pl.when(pl.program_id(2) == pl.num_programs(2) - 1)
        def _():
            finalize(acc_ref[...])
    else:
        finalize(part)


def _linear(x2, w, b=None, *, activation=None, residual=None,
            residual_scale=1.0, ln=None, ln_eps=1e-5,
            tm_target=256, tn_target=512, tk_target=512):
    m, k = x2.shape
    k2, n = w.shape
    assert k == k2

    tk = _pick_divisor_tile(k, tk_target, 128)
    tn = _pick_divisor_tile(n, tn_target, 128)

    has_ln = (ln is not None) and (tk == k)
    if (ln is not None) and not has_ln:
        # K axis is tiled -> LN needs the whole row; fall back to a
        # standalone LayerNorm kernel before the matmul.
        x2 = _layer_norm(x2, ln[0], ln[1], eps=ln_eps)

    tm = min(tm_target, _round_up(m, 8))
    xp, m0 = _pad_rows(x2, tm)
    mp = xp.shape[0]

    if b is None:
        b = jnp.zeros((n,), x2.dtype)
    b2 = b.reshape(1, n)

    inputs = [xp, w, b2]
    in_specs = [
        pl.BlockSpec((tm, tk), lambda i, j, kk: (i, kk)),
        pl.BlockSpec((tk, tn), lambda i, j, kk: (kk, j)),
        pl.BlockSpec((1, tn), lambda i, j, kk: (0, j)),
    ]
    if has_ln:
        inputs += [ln[0].reshape(1, k), ln[1].reshape(1, k)]
        in_specs += [pl.BlockSpec((1, k), lambda i, j, kk: (0, 0)),
                     pl.BlockSpec((1, k), lambda i, j, kk: (0, 0))]
    has_residual = residual is not None
    if has_residual:
        rp, _ = _pad_rows(residual, tm)
        inputs.append(rp)
        in_specs.append(pl.BlockSpec((tm, tn), lambda i, j, kk: (i, j)))

    nk = k // tk
    use_acc = nk > 1
    scratch = [pltpu.VMEM((tm, tn), jnp.float32)] if use_acc else []

    kernel = functools.partial(
        _linear_kernel, activation=activation,
        residual_scale=float(residual_scale), has_residual=has_residual,
        has_ln=has_ln, ln_eps=float(ln_eps), use_acc=use_acc)

    out = pl.pallas_call(
        kernel,
        out_shape=jax.ShapeDtypeStruct((mp, n), x2.dtype),
        grid_spec=pltpu.PrefetchScalarGridSpec(
            num_scalar_prefetch=0,
            grid=(mp // tm, n // tn, nk),
            in_specs=in_specs,
            out_specs=pl.BlockSpec((tm, tn), lambda i, j, kk: (i, j)),
            scratch_shapes=scratch,
        ),
        compiler_params=pltpu.CompilerParams(
            dimension_semantics=("parallel", "parallel", "arbitrary")),
    )(*inputs)
    return out[:m0]


# ----------------------------------------------------------------------------
# Attention core kernel: a group of (batch, head) pairs per grid step
# ----------------------------------------------------------------------------
def _attn_kernel(q_ref, k_ref, v_ref, o_ref, *, scale):
    q = q_ref[...].astype(jnp.float32) * scale        # (G, N, hd)
    k = k_ref[...].astype(jnp.float32)                # (G, N, hd)
    v = v_ref[...].astype(jnp.float32)                # (G, N, hd)
    s = jnp.einsum("gnd,gmd->gnm", q, k,
                   preferred_element_type=jnp.float32)           # (G, N, N)
    s = s - jnp.max(s, axis=-1, keepdims=True)
    p = jnp.exp(s)
    denom = jnp.sum(p, axis=-1, keepdims=True)
    p = p * pl.reciprocal(denom, approx=True)
    o = jnp.einsum("gnm,gmd->gnd", p, v,
                   preferred_element_type=jnp.float32)           # (G, N, hd)
    o_ref[...] = o.astype(o_ref.dtype)


def _attention_core(q, k, v, scale):
    bh, n, hd = q.shape
    # f32 VMEM footprint per (batch, head): q,k,v,o tiles + the NxN score tile
    per_head_bytes = 4 * (4 * n * hd + n * n)
    budget = 4 << 20
    g = 1
    for cand in range(bh, 0, -1):
        if bh % cand == 0 and cand * per_head_bytes <= budget:
            g = cand
            break

    spec = pl.BlockSpec((g, n, hd), lambda i: (i, 0, 0))
    return pl.pallas_call(
        functools.partial(_attn_kernel, scale=float(scale)),
        out_shape=jax.ShapeDtypeStruct((bh, n, hd), q.dtype),
        grid_spec=pltpu.PrefetchScalarGridSpec(
            num_scalar_prefetch=0,
            grid=(bh // g,),
            in_specs=[spec, spec, spec],
            out_specs=pl.BlockSpec((g, n, hd), lambda i: (i, 0, 0)),
        ),
        compiler_params=pltpu.CompilerParams(
            dimension_semantics=("parallel",)),
    )(q, k, v)


# ----------------------------------------------------------------------------
# Block forward (Pallas) and pure-JAX reference
# ----------------------------------------------------------------------------
def block_forward(x, params, *, num_heads, head_dim, skip_lam=1.0, eps=1e-5):
    B, N, C = x.shape
    M = B * N
    H, hd = num_heads, head_dim
    scale = hd ** (-0.5)
    x2 = x.reshape(M, C)

    # --- attention branch: LN1 fused into the QKV matmul ---
    qkv = _linear(x2, params["qkv_w"], params.get("qkv_b"),
                  ln=(params["norm1_g"], params["norm1_b"]), ln_eps=eps)
    qkv = qkv.reshape(B, N, 3, H, hd).transpose(2, 0, 3, 1, 4)   # (3,B,H,N,hd)
    q = qkv[0].reshape(B * H, N, hd)
    k = qkv[1].reshape(B * H, N, hd)
    v = qkv[2].reshape(B * H, N, hd)
    ao = _attention_core(q, k, v, scale)                          # (BH,N,hd)
    ao = ao.reshape(B, H, N, hd).transpose(0, 2, 1, 3).reshape(M, H * hd)
    x2 = _linear(ao, params["proj_w"], params["proj_b"],
                 residual=x2, residual_scale=1.0 / skip_lam)

    # --- MLP branch: LN2 fused into fc1, residual fused into fc2 ---
    h = _linear(x2, params["fc1_w"], params["fc1_b"], activation="gelu",
                ln=(params["norm2_g"], params["norm2_b"]), ln_eps=eps)
    x2 = _linear(h, params["fc2_w"], params["fc2_b"],
                 residual=x2, residual_scale=1.0 / skip_lam)

    return x2.reshape(B, N, C)


def block_forward_ref(x, params, *, num_heads, head_dim, skip_lam=1.0, eps=1e-5):
    """Pure-JAX reference mirroring the PyTorch Block forward (eval mode)."""
    B, N, C = x.shape
    H, hd = num_heads, head_dim
    scale = hd ** (-0.5)

    def ln(z, g, b):
        z32 = z.astype(jnp.float32)
        mu = z32.mean(-1, keepdims=True)
        var = ((z32 - mu) ** 2).mean(-1, keepdims=True)
        return ((z32 - mu) * lax.rsqrt(var + eps) * g + b).astype(z.dtype)

    def gelu_tanh(z):
        c = jnp.float32(0.7978845608028654)
        return 0.5 * z * (1.0 + jnp.tanh(c * (z + 0.044715 * z ** 3)))

    # attention branch
    h = ln(x, params["norm1_g"], params["norm1_b"]).reshape(B * N, C)
    qkv = h @ params["qkv_w"]
    if params.get("qkv_b") is not None:
        qkv = qkv + params["qkv_b"]
    qkv = qkv.reshape(B, N, 3, H, hd).transpose(2, 0, 3, 1, 4)
    q, k, v = qkv[0], qkv[1], qkv[2]
    s = jnp.einsum("bhnd,bhmd->bhnm", q * scale, k)
    p = jax.nn.softmax(s, axis=-1)
    ao = jnp.einsum("bhnm,bhmd->bhnd", p, v)
    ao = ao.transpose(0, 2, 1, 3).reshape(B * N, H * hd)
    ao = ao @ params["proj_w"] + params["proj_b"]
    x = x + ao.reshape(B, N, C) / skip_lam

    # MLP branch
    h = ln(x, params["norm2_g"], params["norm2_b"]).reshape(B * N, C)
    h = gelu_tanh(h @ params["fc1_w"] + params["fc1_b"])
    out = h @ params["fc2_w"] + params["fc2_b"]
    x = x + out.reshape(B, N, C) / skip_lam
    return x


# ----------------------------------------------------------------------------
# demo / self-check
# ----------------------------------------------------------------------------
if __name__ == "__main__":
    B, N = 2, 16
    dim = 128            # lane-dense channel dim (>= 128)
    num_heads = 4
    head_dim = dim // num_heads
    mlp_ratio = 4.0
    hidden = int(dim * mlp_ratio)
    skip_lam = 2.0       # exercise the 1/skip_lam residual scaling

    key = jax.random.PRNGKey(0)
    ks = jax.random.split(key, 9)

    def init(k, shape, scl):
        return scl * jax.random.normal(k, shape, dtype=jnp.float32)

    params = dict(
        norm1_g=1.0 + 0.02 * jnp.arange(dim, dtype=jnp.float32),
        norm1_b=0.01 * jnp.arange(dim, dtype=jnp.float32),
        qkv_w=init(ks[0], (dim, 3 * num_heads * head_dim), 0.05),
        qkv_b=None,                                  # qkv_bias=False (default)
        proj_w=init(ks[1], (num_heads * head_dim, dim), 0.05),
        proj_b=init(ks[2], (dim,), 0.02),
        norm2_g=1.0 - 0.01 * jnp.arange(dim, dtype=jnp.float32) / dim,
        norm2_b=-0.02 * jnp.ones((dim,), jnp.float32),
        fc1_w=init(ks[3], (dim, hidden), 0.05),
        fc1_b=init(ks[4], (hidden,), 0.02),
        fc2_w=init(ks[5], (hidden, dim), 0.05),
        fc2_b=init(ks[6], (dim,), 0.02),
    )
    x = jax.random.normal(ks[7], (B, N, dim), dtype=jnp.float32)

    out = block_forward(x, params, num_heads=num_heads, head_dim=head_dim,
                        skip_lam=skip_lam)
    out = jax.block_until_ready(out)

    with jax.default_matmul_precision("highest"):
        ref = block_forward_ref(x, params, num_heads=num_heads,
                                head_dim=head_dim, skip_lam=skip_lam)

    assert out.shape == (B, N, dim)
    max_err = float(jnp.max(jnp.abs(out - ref)))
    # tolerance covers MXU-vs-XLA matmul precision paths + approx reciprocal
    assert jnp.allclose(out, ref, atol=5e-3, rtol=5e-3), max_err

    print("KERNEL_OK")
</pallas_src>

<mosaic_0001>
module attributes {stable_mosaic.version = 11 : i64} {
  func.func @_linear_kernel(%arg0: i32, %arg1: i32, %arg2: i32, %arg3: memref<32x128xf32, #tpu.memory_space<vmem>>, %arg4: memref<128x384xf32, #tpu.memory_space<vmem>>, %arg5: memref<1x384xf32, #tpu.memory_space<vmem>>, %arg6: memref<1x128xf32, #tpu.memory_space<vmem>>, %arg7: memref<1x128xf32, #tpu.memory_space<vmem>>, %arg8: memref<32x384xf32, #tpu.memory_space<vmem>>) attributes {dimension_semantics = [#tpu.dimension_semantics<parallel>, #tpu.dimension_semantics<parallel>, #tpu.dimension_semantics<arbitrary>], iteration_bounds = array<i64: 1, 1, 1>, scalar_prefetch = 0 : i64, scratch_operands = 0 : i64, tpu.core_type = #tpu.core_type<tc>, window_params = [{transform_indices = @transform_0, window_bounds = array<i64: 32, 128>}, {transform_indices = @transform_1, window_bounds = array<i64: 128, 384>}, {transform_indices = @transform_2, window_bounds = array<i64: 1, 384>}, {pipeline_mode = #tpu.pipeline_mode<synchronous>, transform_indices = @transform_3, window_bounds = array<i64: 1, 128>}, {pipeline_mode = #tpu.pipeline_mode<synchronous>, transform_indices = @transform_4, window_bounds = array<i64: 1, 128>}, {transform_indices = @transform_5, window_bounds = array<i64: 32, 384>}]} {
    %c0 = arith.constant 0 : index
    %c0_0 = arith.constant 0 : index
    %0 = vector.load %arg3[%c0, %c0_0] : memref<32x128xf32, #tpu.memory_space<vmem>>, vector<32x128xf32>
    %cst = arith.constant dense<0.000000e+00> : vector<32xf32>
    %1 = vector.multi_reduction <add>, %0, %cst [1] : vector<32x128xf32> to vector<32xf32>
    %2 = vector.shape_cast %1 : vector<32xf32> to vector<32x1xf32>
    %3 = arith.mulf %0, %0 : vector<32x128xf32>
    %cst_1 = arith.constant dense<0.000000e+00> : vector<32xf32>
    %4 = vector.multi_reduction <add>, %3, %cst_1 [1] : vector<32x128xf32> to vector<32xf32>
    %5 = vector.shape_cast %4 : vector<32xf32> to vector<32x1xf32>
    %cst_2 = arith.constant 7.812500e-03 : f32
    %6 = vector.broadcast %cst_2 : f32 to vector<32x1xf32>
    %7 = arith.mulf %2, %6 : vector<32x1xf32>
    %cst_3 = arith.constant 7.812500e-03 : f32
    %8 = vector.broadcast %cst_3 : f32 to vector<32x1xf32>
    %9 = arith.mulf %5, %8 : vector<32x1xf32>
    %10 = arith.mulf %7, %7 : vector<32x1xf32>
    %11 = arith.subf %9, %10 : vector<32x1xf32>
    %cst_4 = arith.constant 9.99999974E-6 : f32
    %12 = vector.broadcast %cst_4 : f32 to vector<32x1xf32>
    %13 = arith.addf %11, %12 : vector<32x1xf32>
    %14 = math.rsqrt %13 : vector<32x1xf32>
    %c0_5 = arith.constant 0 : index
    %c0_6 = arith.constant 0 : index
    %15 = vector.load %arg6[%c0_5, %c0_6] : memref<1x128xf32, #tpu.memory_space<vmem>>, vector<1x128xf32>
    %16 = vector.broadcast %14 : vector<32x1xf32> to vector<32x128xf32>
    %17 = vector.broadcast %15 : vector<1x128xf32> to vector<32x128xf32>
    %18 = arith.mulf %16, %17 : vector<32x128xf32>
    %c0_7 = arith.constant 0 : index
    %c0_8 = arith.constant 0 : index
    %19 = vector.load %arg7[%c0_7, %c0_8] : memref<1x128xf32, #tpu.memory_space<vmem>>, vector<1x128xf32>
    %20 = vector.broadcast %7 : vector<32x1xf32> to vector<32x128xf32>
    %21 = arith.mulf %20, %18 : vector<32x128xf32>
    %22 = vector.broadcast %19 : vector<1x128xf32> to vector<32x128xf32>
    %23 = arith.subf %22, %21 : vector<32x128xf32>
    %24 = arith.mulf %0, %18 : vector<32x128xf32>
    %25 = arith.addf %24, %23 : vector<32x128xf32>
    %c0_9 = arith.constant 0 : index
    %c0_10 = arith.constant 0 : index
    %26 = vector.load %arg4[%c0_9, %c0_10] : memref<128x384xf32, #tpu.memory_space<vmem>>, vector<128x384xf32>
    %cst_11 = arith.constant dense<0.000000e+00> : vector<32x384xf32>
    %27 = tpu.matmul %25, %26, %cst_11 {dimension_numbers = #tpu.dot_dimension_numbers<[1], [0], [0], [1], [0, 0, 1, 1], [], []>} : vector<32x128xf32>, vector<128x384xf32>, vector<32x384xf32> -> vector<32x384xf32>
    %c0_12 = arith.constant 0 : index
    %c0_13 = arith.constant 0 : index
    %28 = vector.load %arg5[%c0_12, %c0_13] : memref<1x384xf32, #tpu.memory_space<vmem>>, vector<1x384xf32>
    %29 = vector.broadcast %28 : vector<1x384xf32> to vector<32x384xf32>
    %30 = arith.addf %27, %29 : vector<32x384xf32>
    %c0_14 = arith.constant 0 : index
    %c0_15 = arith.constant 0 : index
    %31 = vector.load %arg8[%c0_14, %c0_15] : memref<32x384xf32, #tpu.memory_space<vmem>>, vector<32x384xf32>
    tpu.vector_store %arg8[%c0_14, %c0_15], %30 {strides = array<i32>} : memref<32x384xf32, #tpu.memory_space<vmem>>, vector<32x384xf32>,
    return
  }
  func.func @transform_0(%arg0: i32, %arg1: i32, %arg2: i32) -> (i32, i32) {
    %c0_i32 = arith.constant 0 : i32
    return %arg0, %arg2 : i32, i32
  }
  func.func @transform_1(%arg0: i32, %arg1: i32, %arg2: i32) -> (i32, i32) {
    %c0_i32 = arith.constant 0 : i32
    return %arg2, %arg1 : i32, i32
  }
  func.func @transform_2(%arg0: i32, %arg1: i32, %arg2: i32) -> (i32, i32) {
    %c0_i32 = arith.constant 0 : i32
    %c0_i32_0 = arith.constant 0 : i32
    return %c0_i32, %arg1 : i32, i32
  }
  func.func @transform_3(%arg0: i32, %arg1: i32, %arg2: i32) -> (i32, i32) {
    %c0_i32 = arith.constant 0 : i32
    %c0_i32_0 = arith.constant 0 : i32
    %c0_i32_1 = arith.constant 0 : i32
    return %c0_i32, %c0_i32_0 : i32, i32
  }
  func.func @transform_4(%arg0: i32, %arg1: i32, %arg2: i32) -> (i32, i32) {
    %c0_i32 = arith.constant 0 : i32
    %c0_i32_0 = arith.constant 0 : i32
    %c0_i32_1 = arith.constant 0 : i32
    return %c0_i32, %c0_i32_0 : i32, i32
  }
  func.func @transform_5(%arg0: i32, %arg1: i32, %arg2: i32) -> (i32, i32) {
    %c0_i32 = arith.constant 0 : i32
    return %arg0, %arg1 : i32, i32
  }
}

</mosaic_0001>

<llo_original>
// kernel: tpu_custom_call.1
$region0: #{tpu_custom_call.1}
  #allocation0 [shape = 'u32[]', space=smem, size = 0x4, offset = 0x4, fixed_abs, tag = 'smem constant byte address 0x4 - core index']
  #allocation1 [shape = 'u32[144,128]{1,0:T(1,128)}', space=vmem, size = 0x12000, scoped, tag = 'internal scratch']
  %s0 = inlined_call_operand.hbm [shape: f32[32,128], index: 0, kind: input, shape index: {}]
  %s1 = inlined_call_operand.hbm [shape: f32[128,384], index: 1, kind: input, shape index: {}]
  %s2 = inlined_call_operand.vmem [shape: f32[1,384], index: 2, kind: input, shape index: {}]
  %s3 = inlined_call_operand.vmem [shape: f32[1,128], index: 3, kind: input, shape index: {}]
  %s4 = inlined_call_operand.vmem [shape: f32[1,128], index: 4, kind: input, shape index: {}]
  %s5 = inlined_call_operand.hbm [shape: f32[32,384], index: 5, kind: output, shape index: {}]
  %s6 = sld [smem:[#allocation0]]
  $region38: #{tpu_custom_call.1} parent=0
    _
  %s8 = ssub.s32 1, %s6
  %s9 = scalar_select 0, %s8, %s6
  $region1: #{tpu_custom_call.1} parent=0
    #allocation2 [shape = 'u8[16384]{0}', space=vmem, size = 0x4000, scoped, tag = 'input window, operand 0, single buffered']
    #allocation3 [shape = 's32[1]{0}', space=sflag, size = 0x4, scoped, tag = 'scoped memory for tpu_custom_call.1']
    #allocation4 [shape = 's32[1]{0}', space=sflag, size = 0x4, scoped, tag = 'scoped memory for tpu_custom_call.1']
    #allocation5 [shape = 'u8[196608]{0}', space=vmem, size = 0x30000, scoped, tag = 'input window, operand 1, single buffered']
    #allocation6 [shape = 's32[1]{0}', space=sflag, size = 0x4, scoped, tag = 'scoped memory for tpu_custom_call.1']
    #allocation7 [shape = 'u8[49152]{0}', space=vmem, size = 0xc000, scoped, tag = 'output window, operand 0, single buffered']
    %10 = vsyncpa [#allocation3], 0
    %11 = vsyncpa [#allocation6], 0
    %12 = vsyncpa [#allocation4], 0
    // Predicated region
    $region2: #{tpu_custom_call.1} parent=1 // pred_check
      _
    $region3: #{tpu_custom_call.1} parent=1 // pred_check_branch
      %14 = sbr.rel (0) target = $region5
    $region4: #{tpu_custom_call.1} parent=1 // pred_region
      %s16 = ssub.s32 512, 512
      %17 = vsyncadd [#allocation3], %s16
      %s18 = sshll.u32 [#allocation2], 4
      %s19 = int_to_ptr.vmem [resolvable:$true] %s18
      %24 = dma.hbm_to_vmem [thread:$0]  %s0, 512, %s19, [#allocation3], 128, 128, 8
    $region5: #{tpu_custom_call.1} parent=1 // pred_fallthru
      _
    // Predicated region
    $region6: #{tpu_custom_call.1} parent=1 // pred_check
      _
    $region7: #{tpu_custom_call.1} parent=1 // pred_check_branch
      %26 = sbr.rel (0) target = $region9
    $region8: #{tpu_custom_call.1} parent=1 // pred_region
      %s28 = ssub.s32 6144, 6144
      %29 = vsyncadd [#allocation6], %s28
      %s30 = sshll.u32 [#allocation5], 4
      %s31 = int_to_ptr.vmem [resolvable:$true] %s30
      %36 = dma.hbm_to_vmem [thread:$0]  %s1, 6144, %s31, [#allocation6], 384, 384, 24
    $region9: #{tpu_custom_call.1} parent=1 // pred_fallthru
      _
    // Predicated region
    $region10: #{tpu_custom_call.1} parent=1 // pred_check
      _
    $region11: #{tpu_custom_call.1} parent=1 // pred_check_branch
      %38 = sbr.rel (0) target = $region13
    $region12: #{tpu_custom_call.1} parent=1 // pred_region
      _
    $region13: #{tpu_custom_call.1} parent=1 // pred_fallthru
      _
    // Predicated region
    $region14: #{tpu_custom_call.1} parent=1 // pred_check
      _
    $region15: #{tpu_custom_call.1} parent=1 // pred_check_branch
      %40 = sbr.rel (0) target = $region17
    $region16: #{tpu_custom_call.1} parent=1 // pred_region
      _
    $region17: #{tpu_custom_call.1} parent=1 // pred_fallthru
      _
    // Predicated region
    $region18: #{tpu_custom_call.1} parent=1 // pred_check
      _
    $region19: #{tpu_custom_call.1} parent=1 // pred_check_branch
      %42 = sbr.rel (0) target = $region21
    $region20: #{tpu_custom_call.1} parent=1 // pred_region
      _
    $region21: #{tpu_custom_call.1} parent=1 // pred_fallthru
      _
    // Predicated region
    $region22: #{tpu_custom_call.1} parent=1 // pred_check
      _
    $region23: #{tpu_custom_call.1} parent=1 // pred_check_branch
      %44 = sbr.rel (0) target = $region25
    $region24: #{tpu_custom_call.1} parent=1 // pred_region
      %45 = dma.done [#allocation3], 512
    $region25: #{tpu_custom_call.1} parent=1 // pred_fallthru
      _
    // Predicated region
    $region26: #{tpu_custom_call.1} parent=1 // pred_check
      _
    $region27: #{tpu_custom_call.1} parent=1 // pred_check_branch
      %47 = sbr.rel (0) target = $region29
    $region28: #{tpu_custom_call.1} parent=1 // pred_region
      %48 = dma.done [#allocation6], 6144
    $region29: #{tpu_custom_call.1} parent=1 // pred_fallthru
      _
    %v49 = vld [vmem:[#allocation2] sm:$0xff]
    %v50 = vld [vmem:[#allocation2 + $0x8] sm:$0xff]
    %v51 = vld [vmem:[#allocation2 + $0x10] sm:$0xff]
    %v52 = vld [vmem:[#allocation2 + $0x18] sm:$0xff]
    %53 = vadd.xlane.f32.xlu0 %v49
    %v54 = vpop.xlane.xlu0 %53
    %55 = vadd.xlane.f32.xlu0 %v50
    %v56 = vpop.xlane.xlu0 %55
    %57 = vadd.xlane.f32.xlu0 %v51
    %v58 = vpop.xlane.xlu0 %57
    %59 = vadd.xlane.f32.xlu0 %v52
    %v60 = vpop.xlane.xlu0 %59
    %v61 = vmul.f32 %v49, %v49
    %v62 = vmul.f32 %v50, %v50
    %v63 = vmul.f32 %v51, %v51
    %v64 = vmul.f32 %v52, %v52
    %65 = vadd.xlane.f32.xlu0 %v61
    %v66 = vpop.xlane.xlu0 %65
    %67 = vadd.xlane.f32.xlu0 %v62
    %v68 = vpop.xlane.xlu0 %67
    %69 = vadd.xlane.f32.xlu0 %v63
    %v70 = vpop.xlane.xlu0 %69
    %71 = vadd.xlane.f32.xlu0 %v64
    %v72 = vpop.xlane.xlu0 %71
    %v73 = vmul.f32 %v54, 0.0078125
    %v74 = vmul.f32 %v56, 0.0078125
    %v75 = vmul.f32 %v58, 0.0078125
    %v76 = vmul.f32 %v60, 0.0078125
    %v77 = vmul.f32 %v66, 0.0078125
    %v78 = vmul.f32 %v68, 0.0078125
    %v79 = vmul.f32 %v70, 0.0078125
    %v80 = vmul.f32 %v72, 0.0078125
    %v81 = vmul.f32 %v73, %v73
    %v82 = vmul.f32 %v74, %v74
    %v83 = vmul.f32 %v75, %v75
    %v84 = vmul.f32 %v76, %v76
    %v85 = vsub.f32 %v77, %v81
    %v86 = vsub.f32 %v78, %v82
    %v87 = vsub.f32 %v79, %v83
    %v88 = vsub.f32 %v80, %v84
    %v89 = vadd.f32 %v85, 1e-05
    %v90 = vadd.f32 %v86, 1e-05
    %v91 = vadd.f32 %v87, 1e-05
    %v92 = vadd.f32 %v88, 1e-05
    %v93 = vrsqrt.pop %v89
    %v94 = vrsqrt.pop %v90
    %v95 = vrsqrt.pop %v91
    %v96 = vrsqrt.pop %v92
    %v97 = vld [vmem:[%s3] sm:$0x1]
    %v99 = vlaneseq
    %v100 = vshrl.u32 %v99, 7
    %v101 = vsub.s32 0, %v100
    %v102 = vrot.slane %v97, %v101
    %v104 = vmul.f32 %v93, %v102
    %v105 = vmul.f32 %v94, %v102
    %v106 = vmul.f32 %v95, %v102
    %v107 = vmul.f32 %v96, %v102
    %v108 = vld [vmem:[%s4] sm:$0x1]
    %v109 = vmul.f32 %v73, %v104
    %v110 = vmul.f32 %v74, %v105
    %v111 = vmul.f32 %v75, %v106
    %v112 = vmul.f32 %v76, %v107
    %v114 = vlaneseq
    %v115 = vshrl.u32 %v114, 7
    %v116 = vsub.s32 0, %v115
    %v117 = vrot.slane %v108, %v116
    %v119 = vsub.f32 %v117, %v109
    %v120 = vsub.f32 %v117, %v110
    %v121 = vsub.f32 %v117, %v111
    %v122 = vsub.f32 %v117, %v112
    %v123 = vmul.f32 %v49, %v104
    %v124 = vmul.f32 %v50, %v105
    %v125 = vmul.f32 %v51, %v106
    %v126 = vmul.f32 %v52, %v107
    %v127 = vadd.f32 %v123, %v119
    %v128 = vadd.f32 %v124, %v120
    %v129 = vadd.f32 %v125, %v121
    %v130 = vadd.f32 %v126, %v122
    %v131 = vld [vmem:[#allocation5] sm:$0xff]
    %v132 = vld [vmem:[#allocation5 + $0x8] sm:$0xff]
    %v133 = vld [vmem:[#allocation5 + $0x10] sm:$0xff]
    %v134 = vld [vmem:[#allocation5 + $0x18] sm:$0xff]
    %v135 = vld [vmem:[#allocation5 + $0x20] sm:$0xff]
    %v136 = vld [vmem:[#allocation5 + $0x28] sm:$0xff]
    %v137 = vld [vmem:[#allocation5 + $0x30] sm:$0xff]
    %v138 = vld [vmem:[#allocation5 + $0x38] sm:$0xff]
    %v139 = vld [vmem:[#allocation5 + $0x40] sm:$0xff]
    %v140 = vld [vmem:[#allocation5 + $0x48] sm:$0xff]
    %v141 = vld [vmem:[#allocation5 + $0x50] sm:$0xff]
    %v142 = vld [vmem:[#allocation5 + $0x58] sm:$0xff]
    %v143 = vld [vmem:[#allocation5 + $0x60] sm:$0xff]
    %v144 = vld [vmem:[#allocation5 + $0x68] sm:$0xff]
    %v145 = vld [vmem:[#allocation5 + $0x70] sm:$0xff]
    %v146 = vld [vmem:[#allocation5 + $0x78] sm:$0xff]
    %v147 = vld [vmem:[#allocation5 + $0x80] sm:$0xff]
    %v148 = vld [vmem:[#allocation5 + $0x88] sm:$0xff]
    %v149 = vld [vmem:[#allocation5 + $0x90] sm:$0xff]
    %v150 = vld [vmem:[#allocation5 + $0x98] sm:$0xff]
    %v151 = vld [vmem:[#allocation5 + $0xa0] sm:$0xff]
    %v152 = vld [vmem:[#allocation5 + $0xa8] sm:$0xff]
    %v153 = vld [vmem:[#allocation5 + $0xb0] sm:$0xff]
    %v154 = vld [vmem:[#allocation5 + $0xb8] sm:$0xff]
    %v155 = vld [vmem:[#allocation5 + $0xc0] sm:$0xff]
    %v156 = vld [vmem:[#allocation5 + $0xc8] sm:$0xff]
    %v157 = vld [vmem:[#allocation5 + $0xd0] sm:$0xff]
    %v158 = vld [vmem:[#allocation5 + $0xd8] sm:$0xff]
    %v159 = vld [vmem:[#allocation5 + $0xe0] sm:$0xff]
    %v160 = vld [vmem:[#allocation5 + $0xe8] sm:$0xff]
    %v161 = vld [vmem:[#allocation5 + $0xf0] sm:$0xff]
    %v162 = vld [vmem:[#allocation5 + $0xf8] sm:$0xff]
    %v163 = vld [vmem:[#allocation5 + $0x100] sm:$0xff]
    %v164 = vld [vmem:[#allocation5 + $0x108] sm:$0xff]
    %v165 = vld [vmem:[#allocation5 + $0x110] sm:$0xff]
    %v166 = vld [vmem:[#allocation5 + $0x118] sm:$0xff]
    %v167 = vld [vmem:[#allocation5 + $0x120] sm:$0xff]
    %v168 = vld [vmem:[#allocation5 + $0x128] sm:$0xff]
    %v169 = vld [vmem:[#allocation5 + $0x130] sm:$0xff]
    %v170 = vld [vmem:[#allocation5 + $0x138] sm:$0xff]
    %v171 = vld [vmem:[#allocation5 + $0x140] sm:$0xff]
    %v172 = vld [vmem:[#allocation5 + $0x148] sm:$0xff]
    %v173 = vld [vmem:[#allocation5 + $0x150] sm:$0xff]
    %v174 = vld [vmem:[#allocation5 + $0x158] sm:$0xff]
    %v175 = vld [vmem:[#allocation5 + $0x160] sm:$0xff]
    %v176 = vld [vmem:[#allocation5 + $0x168] sm:$0xff]
    %v177 = vld [vmem:[#allocation5 + $0x170] sm:$0xff]
    %v178 = vld [vmem:[#allocation5 + $0x178] sm:$0xff]
    %v179 = vld [vmem:[%s2] sm:$0x7]
    %v181 = vlaneseq
    %v182 = vshrl.u32 %v181, 7
    %v183 = vsub.s32 0, %v182
    %v184 = vrot.slane %v179, %v183
    %v185 = vlaneseq
    %v186 = vshrl.u32 %v185, 7
    %v187 = vsub.s32 1, %v186
    %v188 = vrot.slane %v179, %v187
    %v189 = vlaneseq
    %v190 = vshrl.u32 %v189, 7
    %v191 = vsub.s32 2, %v190
    %v192 = vrot.slane %v179, %v191
    %196 = vmatprep.subr.mxu0 %v177
    %197 = vmatpush1.msra.mxu0 %v176
    %198 = vmatprep.subr.mxu0 %v174
    %199 = vmatpush1.msra.mxu0 %v173
    %200 = vmatprep.subr.mxu0 %v171
    %201 = vmatpush1.msra.mxu0 %v170
    %202 = vmatprep.subr.mxu0 %v168
    %203 = vmatpush1.msra.mxu0 %v167
    %204 = vmatprep.subr.mxu0 %v165
    %205 = vmatpush1.msra.mxu0 %v164
    %206 = vmatprep.subr.mxu0 %v162
    %207 = vmatpush1.msra.mxu0 %v161
    %208 = vmatprep.subr.mxu0 %v159
    %209 = vmatpush1.msra.mxu0 %v158
    %210 = vmatprep.subr.mxu0 %v156
    %211 = vmatpush1.msra.mxu0 %v155
    %212 = vmatprep.subr.mxu0 %v153
    %213 = vmatpush1.msra.mxu0 %v152
    %214 = vmatprep.subr.mxu0 %v150
    %215 = vmatpush1.msra.mxu0 %v149
    %216 = vmatprep.subr.mxu0 %v147
    %217 = vmatpush1.msra.mxu0 %v146
    %218 = vmatprep.subr.mxu0 %v144
    %219 = vmatpush1.msra.mxu0 %v143
    %220 = vmatprep.subr.mxu0 %v141
    %221 = vmatpush1.msra.mxu0 %v140
    %222 = vmatprep.subr.mxu0 %v138
    %223 = vmatpush1.msra.mxu0 %v137
    %224 = vmatprep.subr.mxu0 %v135
    %225 = vmatpush1.msra.mxu0 %v134
    %226 = vmatprep.subr.mxu0 %v132
    %227 = vmatpush1.msra.mxu0 %v131
    %228 = vmatprep.subr.mxu0 0.0
    %229 = vmatpush2.msra.mxu0 0.0
    %230 = vmatprep.subr.mxu0 0.0
    %231 = vmatpush2.msra.mxu0 0.0
    %232 = vmatprep.subr.mxu0 0.0
    %233 = vmatpush2.msra.mxu0 0.0
    %234 = vmatprep.subr.mxu0 0.0
    %235 = vmatpush2.msra.mxu0 0.0
    %236 = vmatprep.subr.mxu0 0.0
    %237 = vmatpush2.msra.mxu0 0.0
    %238 = vmatprep.subr.mxu0 0.0
    %239 = vmatpush2.msra.mxu0 0.0
    %240 = vmatprep.subr.mxu0 0.0
    %241 = vmatpush2.msra.mxu0 0.0
    %242 = vmatprep.subr.mxu0 0.0
    %243 = vmatpush2.msra.mxu0 0.0
    %244 = vmatprep.subr.mxu0 0.0
    %245 = vmatpush2.msra.mxu0 0.0
    %246 = vmatprep.subr.mxu0 0.0
    %247 = vmatpush2.msra.mxu0 0.0
    %248 = vmatprep.subr.mxu0 0.0
    %249 = vmatpush2.msra.mxu0 0.0
    %250 = vmatprep.subr.mxu0 0.0
    %251 = vmatpush2.msra.mxu0 0.0
    %252 = vmatprep.subr.mxu0 0.0
    %253 = vmatpush2.msra.mxu0 0.0
    %254 = vmatprep.subr.mxu0 0.0
    %255 = vmatpush2.msra.mxu0 0.0
    %256 = vmatprep.subr.mxu0 0.0
    %257 = vmatpush2.msra.mxu0 0.0
    %258 = vmatprep.subr.mxu0 0.0
    %259 = vmatpush2.msra.mxu0 0.0
    %260 = vmatprep.mubr.f32.mxu0 0.0
    %261 = vmatmul.mubr.f32.gmra.mxu0 %v127
    %v262 = vpop.f32.mrf.mxu0
    %v263 = vadd.f32 %v184, %v262
    %v264 = vpop.f32.mrf.mxu0
    %v265 = vadd.f32 %v188, %v264
    %266 = vmatprep.mubr.f32.mxu0 0.0
    %267 = vmatmul.mubr.f32.gmra.mxu0 %v128
    %v268 = vpop.f32.mrf.mxu0
    %v269 = vadd.f32 %v184, %v268
    %v270 = vpop.f32.mrf.mxu0
    %v271 = vadd.f32 %v188, %v270
    %272 = vmatprep.mubr.f32.mxu0 0.0
    %273 = vmatmul.mubr.f32.gmra.mxu0 %v129
    %v274 = vpop.f32.mrf.mxu0
    %v275 = vadd.f32 %v184, %v274
    %v276 = vpop.f32.mrf.mxu0
    %v277 = vadd.f32 %v188, %v276
    %278 = vmatprep.mubr.f32.mxu0 0.0
    %279 = vmatmul.mubr.f32.gmra.mxu0 %v130
    %v280 = vpop.f32.mrf.mxu0
    %v281 = vadd.f32 %v184, %v280
    %v282 = vpop.f32.mrf.mxu0
    %v283 = vadd.f32 %v188, %v282
    %284 = vdwg.mxu0
    %285 = vmatprep.subr.mxu0 0.0
    %286 = vmatpush1.msra.mxu0 %v178
    %287 = vmatprep.subr.mxu0 0.0
    %288 = vmatpush1.msra.mxu0 %v175
    %289 = vmatprep.subr.mxu0 0.0
    %290 = vmatpush1.msra.mxu0 %v172
    %291 = vmatprep.subr.mxu0 0.0
    %292 = vmatpush1.msra.mxu0 %v169
    %293 = vmatprep.subr.mxu0 0.0
    %294 = vmatpush1.msra.mxu0 %v166
    %295 = vmatprep.subr.mxu0 0.0
    %296 = vmatpush1.msra.mxu0 %v163
    %297 = vmatprep.subr.mxu0 0.0
    %298 = vmatpush1.msra.mxu0 %v160
    %299 = vmatprep.subr.mxu0 0.0
    %300 = vmatpush1.msra.mxu0 %v157
    %301 = vmatprep.subr.mxu0 0.0
    %302 = vmatpush1.msra.mxu0 %v154
    %303 = vmatprep.subr.mxu0 0.0
    %304 = vmatpush1.msra.mxu0 %v151
    %305 = vmatprep.subr.mxu0 0.0
    %306 = vmatpush1.msra.mxu0 %v148
    %307 = vmatprep.subr.mxu0 0.0
    %308 = vmatpush1.msra.mxu0 %v145
    %309 = vmatprep.subr.mxu0 0.0
    %310 = vmatpush1.msra.mxu0 %v142
    %311 = vmatprep.subr.mxu0 0.0
    %312 = vmatpush1.msra.mxu0 %v139
    %313 = vmatprep.subr.mxu0 0.0
    %314 = vmatpush1.msra.mxu0 %v136
    %315 = vmatprep.subr.mxu0 0.0
    %316 = vmatpush1.msra.mxu0 %v133
    %317 = vmatprep.subr.mxu0 0.0
    %318 = vmatpush2.msra.mxu0 0.0
    %319 = vmatprep.subr.mxu0 0.0
    %320 = vmatpush2.msra.mxu0 0.0
    %321 = vmatprep.subr.mxu0 0.0
    %322 = vmatpush2.msra.mxu0 0.0
    %323 = vmatprep.subr.mxu0 0.0
    %324 = vmatpush2.msra.mxu0 0.0
    %325 = vmatprep.subr.mxu0 0.0
    %326 = vmatpush2.msra.mxu0 0.0
    %327 = vmatprep.subr.mxu0 0.0
    %328 = vmatpush2.msra.mxu0 0.0
    %329 = vmatprep.subr.mxu0 0.0
    %330 = vmatpush2.msra.mxu0 0.0
    %331 = vmatprep.subr.mxu0 0.0
    %332 = vmatpush2.msra.mxu0 0.0
    %333 = vmatprep.subr.mxu0 0.0
    %334 = vmatpush2.msra.mxu0 0.0
    %335 = vmatprep.subr.mxu0 0.0
    %336 = vmatpush2.msra.mxu0 0.0
    %337 = vmatprep.subr.mxu0 0.0
    %338 = vmatpush2.msra.mxu0 0.0
    %339 = vmatprep.subr.mxu0 0.0
    %340 = vmatpush2.msra.mxu0 0.0
    %341 = vmatprep.subr.mxu0 0.0
    %342 = vmatpush2.msra.mxu0 0.0
    %343 = vmatprep.subr.mxu0 0.0
    %344 = vmatpush2.msra.mxu0 0.0
    %345 = vmatprep.subr.mxu0 0.0
    %346 = vmatpush2.msra.mxu0 0.0
    %347 = vmatprep.subr.mxu0 0.0
    %348 = vmatpush2.msra.mxu0 0.0
    %349 = vmatprep.mubr.f32.mxu0 0.0
    %350 = vmatmul.mubr.f32.gmra.mxu0 %v127
    %v351 = vpop.f32.mrf.mxu0
    %v352 = vadd.f32 %v192, %v351
    %v353 = vpop.f32.mrf.mxu0
    %354 = vmatprep.mubr.f32.mxu0 0.0
    %355 = vmatmul.mubr.f32.gmra.mxu0 %v128
    %v356 = vpop.f32.mrf.mxu0
    %v357 = vadd.f32 %v192, %v356
    %v358 = vpop.f32.mrf.mxu0
    %359 = vmatprep.mubr.f32.mxu0 0.0
    %360 = vmatmul.mubr.f32.gmra.mxu0 %v129
    %v361 = vpop.f32.mrf.mxu0
    %v362 = vadd.f32 %v192, %v361
    %v363 = vpop.f32.mrf.mxu0
    %364 = vmatprep.mubr.f32.mxu0 0.0
    %365 = vmatmul.mubr.f32.gmra.mxu0 %v130
    %v366 = vpop.f32.mrf.mxu0
    %v367 = vadd.f32 %v192, %v366
    %v368 = vpop.f32.mrf.mxu0
    %369 = vdwg.mxu0
    %370 = vst [vmem:[#allocation7] sm:$0xff] %v263
    %371 = vst [vmem:[#allocation7 + $0x8] sm:$0xff] %v265
    %372 = vst [vmem:[#allocation7 + $0x10] sm:$0xff] %v352
    %373 = vst [vmem:[#allocation7 + $0x18] sm:$0xff] %v269
    %374 = vst [vmem:[#allocation7 + $0x20] sm:$0xff] %v271
    %375 = vst [vmem:[#allocation7 + $0x28] sm:$0xff] %v357
    %376 = vst [vmem:[#allocation7 + $0x30] sm:$0xff] %v275
    %377 = vst [vmem:[#allocation7 + $0x38] sm:$0xff] %v277
    %378 = vst [vmem:[#allocation7 + $0x40] sm:$0xff] %v362
    %379 = vst [vmem:[#allocation7 + $0x48] sm:$0xff] %v281
    %380 = vst [vmem:[#allocation7 + $0x50] sm:$0xff] %v283
    %381 = vst [vmem:[#allocation7 + $0x58] sm:$0xff] %v367
    // Predicated region
    $region30: #{tpu_custom_call.1} parent=1 // pred_check
      _
    $region31: #{tpu_custom_call.1} parent=1 // pred_check_branch
      %383 = sbr.rel (0) target = $region33
    $region32: #{tpu_custom_call.1} parent=1 // pred_region
      %s385 = ssub.s32 1536, 1536
      %386 = vsyncadd [#allocation4], %s385
      %s387 = sshll.u32 [#allocation7], 4
      %s388 = int_to_ptr.vmem [resolvable:$true] %s387
      %393 = dma.vmem_to_hbm [thread:$0]  %s388, 1536, %s5, [#allocation4], 384, 384, 24
    $region33: #{tpu_custom_call.1} parent=1 // pred_fallthru
      _
    // Predicated region
    $region34: #{tpu_custom_call.1} parent=1 // pred_check
      _
    $region35: #{tpu_custom_call.1} parent=1 // pred_check_branch
      %395 = sbr.rel (0) target = $region37
    $region36: #{tpu_custom_call.1} parent=1 // pred_region
      %396 = dma.done [#allocation4], 1536
    $region37: #{tpu_custom_call.1} parent=1 // pred_fallthru
      _
    %397 = vsyncpa [#allocation3], 1
    %398 = vsyncpa [#allocation6], 1
    %399 = vsyncpa [#allocation4], 1

</llo_original>
